<compile_context>
chip_gen: v5e
topology: v5e:2x2
jax: 0.10.0
libtpu: 0.0.40
codegen_flags: <defaults>
</compile_context>

<pallas_src>
import functools

import jax
import jax.numpy as jnp
from jax import lax
from jax.experimental import pallas as pl
from jax.experimental.pallas import tpu as pltpu

NUM_EMBED = 50  # nn.Embedding(50, num_pos_feats)


def _pos_embed_kernel(x_ref, y_ref, out_ref, *, th, w, split):
    # x_ref:   (F, W)  column embedding, already interpolated, channel-major.
    # y_ref:   (F, H)  row embedding, already interpolated, channel-major.
    # out_ref: (F, TH*W) block [split] or (2F, TH*W) block [non-split] of the
    #          lane-dense (2F, H*W) output.
    f = x_ref.shape[0]
    h = y_ref.shape[1]
    thw = th * w
    hi = pl.program_id(1)

    # floor(k / w) is exact here: k < TH*W and the quotient < H are tiny
    # integers (feature-map sized), far inside f32's exact-integer range, and
    # f32 division is correctly rounded.
    def x_half():
        # sel[j, k] = 1 iff (k mod W) == j  ->  x_emb tiled TH times along lanes.
        k = lax.broadcasted_iota(jnp.int32, (w, thw), 1).astype(jnp.float32)
        j = lax.broadcasted_iota(jnp.int32, (w, thw), 0).astype(jnp.float32)
        q = jnp.floor(k / w)
        sel = ((k - q * w) == j).astype(jnp.float32)          # (W, TH*W)
        # One-hot selector => HIGHEST precision makes this an exact f32 gather.
        return jnp.dot(x_ref[...], sel,
                       preferred_element_type=jnp.float32,
                       precision=lax.Precision.HIGHEST)       # (F, TH*W)

    def y_half():
        # sel[r, k] = 1 iff (hi*TH + k // W) == r  ->  each y value repeated W
        # times along lanes; the row-block offset enters as a scalar.
        k = lax.broadcasted_iota(jnp.int32, (h, thw), 1).astype(jnp.float32)
        r = lax.broadcasted_iota(jnp.int32, (h, thw), 0).astype(jnp.float32)
        row = jnp.floor(k / w) + (hi * th).astype(jnp.float32)
        sel = (row == r).astype(jnp.float32)                  # (H, TH*W)
        return jnp.dot(y_ref[...], sel,
                       preferred_element_type=jnp.float32,
                       precision=lax.Precision.HIGHEST)       # (F, TH*W)

    if split:
        # Channel-half c==0 writes the column (x) half, c==1 the row (y) half.
        @pl.when(pl.program_id(0) == 0)
        def _():
            out_ref[...] = x_half()

        @pl.when(pl.program_id(0) == 1)
        def _():
            out_ref[...] = y_half()
    else:
        # Fallback when F % 8 != 0: one (2F, TH*W) block holds both halves.
        out_ref[:f, :] = x_half()
        out_ref[f:, :] = y_half()


def _pick_row_tile(h, w, f_block, *, prefer_multi,
                   block_budget=8 << 20, sel_budget=8 << 20):
    """Largest TH dividing H such that the lane-dense block is legal
    (TH*W % 128 == 0, or TH == H so the last dim is the full H*W) and the
    output block + in-kernel selector temp fit the VMEM budget."""
    valid = []
    for th in range(1, h + 1):
        if h % th:
            continue
        thw = th * w
        if thw % 128 != 0 and th != h:
            continue
        if f_block * thw * 4 > block_budget:
            continue
        if max(w, h) * thw * 4 > sel_budget:
            continue
        valid.append(th)
    if not valid:
        # TODO(synk): chunk the in-kernel expansion matmul if H*W ever gets so
        # large that the single-block fallback overflows the VMEM budget.
        return h
    if prefer_multi:
        smaller = [t for t in valid if t < h]
        if smaller:
            return max(smaller)
    return max(valid)


def _interp_embed(length, table):
    """Exact f32 fractional gather matching PyTorch get_embed(): (length, F)."""
    n = table.shape[0]
    coord = jnp.arange(length, dtype=jnp.float32) / length * (n - 1)
    floor_c = jnp.floor(coord)
    delta = (coord - floor_c)[:, None]
    fi = floor_c.astype(jnp.int32)
    ci = jnp.minimum(fi + 1, n - 1)
    return table[fi] * (1.0 - delta) + table[ci] * delta


def position_embedding_learned(x, col_embed, row_embed):
    """x: (B, C, H, W). Returns pos: (B, 2*F, H, W) float32 (PyTorch layout)."""
    B = x.shape[0]
    H, W = x.shape[-2:]
    F = col_embed.shape[1]

    # Tiny (F, W)/(F, H) interpolated tables, computed exactly in plain JAX;
    # the kernel is then a pure broadcast-and-store layout kernel.
    x_emb_t = _interp_embed(W, col_embed).T.astype(jnp.float32)   # (F, W)
    y_emb_t = _interp_embed(H, row_embed).T.astype(jnp.float32)   # (F, H)

    split = (F % 8 == 0)          # channel-half blocks need F % 8 == 0
    f_block = F if split else 2 * F
    TH = _pick_row_tile(H, W, f_block, prefer_multi=not split)
    assert H % TH == 0
    NB = H // TH
    THW = TH * W
    n_ch_blocks = 2 if split else 1

    # Real (lane-dense, unpadded) VMEM need: double-buffered output block +
    # selector temp + (tiny) double-buffered inputs + slack.
    block_bytes = f_block * THW * 4
    sel_bytes = max(W, H) * THW * 4
    in_bytes = 4 * (F * W + F * H)
    vmem_limit = int(max(32 << 20, 2 * block_bytes + sel_bytes
                         + 2 * in_bytes + (4 << 20)))

    kernel = functools.partial(_pos_embed_kernel, th=TH, w=W, split=split)

    flat = pl.pallas_call(
        kernel,
        out_shape=jax.ShapeDtypeStruct((2 * F, H * W), jnp.float32),
        grid_spec=pltpu.PrefetchScalarGridSpec(
            num_scalar_prefetch=0,
            grid=(n_ch_blocks, NB),
            in_specs=[
                pl.BlockSpec((F, W), lambda c, hi: (0, 0)),   # full, fetched once
                pl.BlockSpec((F, H), lambda c, hi: (0, 0)),   # full, fetched once
            ],
            out_specs=pl.BlockSpec((f_block, THW), lambda c, hi: (c, hi)),
        ),
        compiler_params=pltpu.CompilerParams(
            dimension_semantics=("parallel", "parallel"),
            vmem_limit_bytes=vmem_limit,
        ),
    )(x_emb_t, y_emb_t)

    # Free reshape (contiguous dims) + lazy batch broadcast: the kernel writes
    # the slab to HBM exactly once, regardless of B.
    pos = flat.reshape(1, 2 * F, H, W)
    return jnp.broadcast_to(pos, (B, 2 * F, H, W))


def _reference(x, col_embed, row_embed):
    """Pure-JAX reference mirroring the PyTorch forward, for sanity checking."""
    H, W = x.shape[-2:]
    B = x.shape[0]
    n = col_embed.shape[0]

    def get_embed(coord, table):
        floor_c = jnp.floor(coord)
        delta = (coord - floor_c)[:, None]
        fi = floor_c.astype(jnp.int32)
        ci = jnp.minimum(fi + 1, n - 1)
        return table[fi] * (1.0 - delta) + table[ci] * delta

    i = jnp.arange(W, dtype=jnp.float32) / W * (n - 1)
    j = jnp.arange(H, dtype=jnp.float32) / H * (n - 1)
    x_emb = get_embed(i, col_embed)   # (W, F)
    y_emb = get_embed(j, row_embed)   # (H, F)
    pos = jnp.concatenate(
        [jnp.broadcast_to(x_emb[None], (H, W, x_emb.shape[-1])),
         jnp.broadcast_to(y_emb[:, None], (H, W, y_emb.shape[-1]))], axis=-1)
    pos = jnp.transpose(pos, (2, 0, 1))[None]
    return jnp.broadcast_to(pos, (B,) + pos.shape[1:])


if __name__ == "__main__":
    key = jax.random.PRNGKey(0)
    k_x, k_col, k_row = jax.random.split(key, 3)

    B, C, H, W = 2, 4, 16, 16
    num_pos_feats = 32  # small for the example (PyTorch default is 256)

    x = jax.random.normal(k_x, (B, C, H, W), dtype=jnp.float32)
    # nn.Embedding default init ~ N(0, 1); deterministic synthetic weights.
    col_embed = jax.random.normal(k_col, (NUM_EMBED, num_pos_feats),
                                  dtype=jnp.float32)
    row_embed = jax.random.normal(k_row, (NUM_EMBED, num_pos_feats),
                                  dtype=jnp.float32)

    pos = position_embedding_learned(x, col_embed, row_embed)
    pos = jax.block_until_ready(pos)

    ref = _reference(x, col_embed, row_embed)
    assert pos.shape == (B, 2 * num_pos_feats, H, W), pos.shape
    err = float(jnp.max(jnp.abs(pos - ref)))
    assert err < 1e-5, err

    print("KERNEL_OK")
</pallas_src>

<mosaic_0001>
module attributes {stable_mosaic.version = 11 : i64} {
  func.func @_pos_embed_kernel(%arg0: i32, %arg1: i32, %arg2: memref<32x16xf32, #tpu.memory_space<vmem>>, %arg3: memref<32x16xf32, #tpu.memory_space<vmem>>, %arg4: memref<32x256xf32, #tpu.memory_space<vmem>>) attributes {dimension_semantics = [#tpu.dimension_semantics<parallel>, #tpu.dimension_semantics<parallel>], iteration_bounds = array<i64: 2, 1>, scalar_prefetch = 0 : i64, scratch_operands = 0 : i64, tpu.core_type = #tpu.core_type<tc>, window_params = [{pipeline_mode = #tpu.pipeline_mode<synchronous>, transform_indices = @transform_0, window_bounds = array<i64: 32, 16>}, {pipeline_mode = #tpu.pipeline_mode<synchronous>, transform_indices = @transform_1, window_bounds = array<i64: 32, 16>}, {transform_indices = @transform_2, window_bounds = array<i64: 32, 256>}]} {
    %c0_i32 = arith.constant 0 : i32
    %0 = arith.cmpi eq, %arg0, %c0_i32 : i32
    %1 = arith.extui %0 : i1 to i32
    %c0_i32_0 = arith.constant 0 : i32
    %2 = arith.cmpi ne, %1, %c0_i32_0 : i32
    scf.if %2 {
      %6 = tpu.iota {dimensions = array<i32: 1>} : vector<16x256xi32>
      %7 = arith.sitofp %6 : vector<16x256xi32> to vector<16x256xf32>
      %8 = tpu.iota {dimensions = array<i32: 0>} : vector<16x256xi32>
      %9 = arith.sitofp %8 : vector<16x256xi32> to vector<16x256xf32>
      %cst = arith.constant 1.600000e+01 : f32
      %10 = vector.broadcast %cst : f32 to vector<16x256xf32>
      %11 = arith.divf %7, %10 : vector<16x256xf32>
      %12 = math.floor %11 : vector<16x256xf32>
      %cst_2 = arith.constant 1.600000e+01 : f32
      %13 = vector.broadcast %cst_2 : f32 to vector<16x256xf32>
      %14 = arith.mulf %12, %13 : vector<16x256xf32>
      %15 = arith.subf %7, %14 : vector<16x256xf32>
      %16 = arith.cmpf oeq, %15, %9 : vector<16x256xf32>
      %17 = arith.extui %16 : vector<16x256xi1> to vector<16x256xi32>
      %18 = arith.sitofp %17 : vector<16x256xi32> to vector<16x256xf32>
      %c0 = arith.constant 0 : index
      %c0_3 = arith.constant 0 : index
      %19 = vector.load %arg2[%c0, %c0_3] : memref<32x16xf32, #tpu.memory_space<vmem>>, vector<32x16xf32>
      %cst_4 = arith.constant dense<0.000000e+00> : vector<32x256xf32>
      %20 = tpu.matmul %19, %18, %cst_4 {dimension_numbers = #tpu.dot_dimension_numbers<[1], [0], [0], [1], [0, 0, 1, 1], [], []>, precision = #tpu.contract_precision<fp32>} : vector<32x16xf32>, vector<16x256xf32>, vector<32x256xf32> -> vector<32x256xf32>
      %c0_5 = arith.constant 0 : index
      %c0_6 = arith.constant 0 : index
      %21 = vector.load %arg4[%c0_5, %c0_6] : memref<32x256xf32, #tpu.memory_space<vmem>>, vector<32x256xf32>
      tpu.vector_store %arg4[%c0_5, %c0_6], %20 {strides = array<i32>} : memref<32x256xf32, #tpu.memory_space<vmem>>, vector<32x256xf32>,
    } else {
    }
    %c1_i32 = arith.constant 1 : i32
    %3 = arith.cmpi eq, %arg0, %c1_i32 : i32
    %4 = arith.extui %3 : i1 to i32
    %c0_i32_1 = arith.constant 0 : i32
    %5 = arith.cmpi ne, %4, %c0_i32_1 : i32
    scf.if %5 {
      %6 = tpu.iota {dimensions = array<i32: 1>} : vector<16x256xi32>
      %7 = arith.sitofp %6 : vector<16x256xi32> to vector<16x256xf32>
      %8 = tpu.iota {dimensions = array<i32: 0>} : vector<16x256xi32>
      %9 = arith.sitofp %8 : vector<16x256xi32> to vector<16x256xf32>
      %cst = arith.constant 1.600000e+01 : f32
      %10 = vector.broadcast %cst : f32 to vector<16x256xf32>
      %11 = arith.divf %7, %10 : vector<16x256xf32>
      %12 = math.floor %11 : vector<16x256xf32>
      %c16_i32 = arith.constant 16 : i32
      %13 = arith.muli %arg1, %c16_i32 : i32
      %14 = arith.sitofp %13 : i32 to f32
      %15 = vector.broadcast %14 : f32 to vector<16x256xf32>
      %16 = arith.addf %12, %15 : vector<16x256xf32>
      %17 = arith.cmpf oeq, %16, %9 : vector<16x256xf32>
      %18 = arith.extui %17 : vector<16x256xi1> to vector<16x256xi32>
      %19 = arith.sitofp %18 : vector<16x256xi32> to vector<16x256xf32>
      %c0 = arith.constant 0 : index
      %c0_2 = arith.constant 0 : index
      %20 = vector.load %arg3[%c0, %c0_2] : memref<32x16xf32, #tpu.memory_space<vmem>>, vector<32x16xf32>
      %cst_3 = arith.constant dense<0.000000e+00> : vector<32x256xf32>
      %21 = tpu.matmul %20, %19, %cst_3 {dimension_numbers = #tpu.dot_dimension_numbers<[1], [0], [0], [1], [0, 0, 1, 1], [], []>, precision = #tpu.contract_precision<fp32>} : vector<32x16xf32>, vector<16x256xf32>, vector<32x256xf32> -> vector<32x256xf32>
      %c0_4 = arith.constant 0 : index
      %c0_5 = arith.constant 0 : index
      %22 = vector.load %arg4[%c0_4, %c0_5] : memref<32x256xf32, #tpu.memory_space<vmem>>, vector<32x256xf32>
      tpu.vector_store %arg4[%c0_4, %c0_5], %21 {strides = array<i32>} : memref<32x256xf32, #tpu.memory_space<vmem>>, vector<32x256xf32>,
    } else {
    }
    return
  }
  func.func @transform_0(%arg0: i32, %arg1: i32) -> (i32, i32) {
    %c0_i32 = arith.constant 0 : i32
    %c0_i32_0 = arith.constant 0 : i32
    %c0_i32_1 = arith.constant 0 : i32
    return %c0_i32, %c0_i32_0 : i32, i32
  }
  func.func @transform_1(%arg0: i32, %arg1: i32) -> (i32, i32) {
    %c0_i32 = arith.constant 0 : i32
    %c0_i32_0 = arith.constant 0 : i32
    %c0_i32_1 = arith.constant 0 : i32
    return %c0_i32, %c0_i32_0 : i32, i32
  }
  func.func @transform_2(%arg0: i32, %arg1: i32) -> (i32, i32) {
    %c0_i32 = arith.constant 0 : i32
    return %arg0, %arg1 : i32, i32
  }
}

</mosaic_0001>

<llo_original>
// kernel: tpu_custom_call.1
$region0: #{tpu_custom_call.1}
  #allocation0 [shape = 'u32[]', space=smem, size = 0x4, offset = 0x4, fixed_abs, tag = 'smem constant byte address 0x4 - core index']
  #allocation1 [shape = 'u32[72,128]{1,0:T(1,128)}', space=vmem, size = 0x9000, scoped, tag = 'internal scratch']
  %s0 = inlined_call_operand.vmem [shape: f32[32,16], index: 0, kind: input, shape index: {}]
  %s1 = inlined_call_operand.vmem [shape: f32[32,16], index: 1, kind: input, shape index: {}]
  %s2 = inlined_call_operand.hbm [shape: f32[64,256], index: 2, kind: output, shape index: {}]
  %s3 = sld [smem:[#allocation0]]
  $region49: #{tpu_custom_call.1} parent=0
    _
  %s5 = ssub.s32 1, %s3
  %s6 = scalar_select 0, %s5, %s3
  $region1: #{tpu_custom_call.1} parent=0
    #allocation2 [shape = 'u8[65536]{0}', space=vmem, size = 0x10000, scoped, tag = 'output window, operand 0']
    #allocation3 [shape = 's32[2]{0}', space=sflag, size = 0x8, scoped, tag = 'scoped memory for tpu_custom_call.1']
    %7 = vsyncpa [#allocation3], 0
    %s8 = scalar_lea.sflag [#allocation3], 1
    %9 = vsyncpa %s8, 0
    loop: start=0, step=1, limit=4
    $region2: #{tpu_custom_call.1} parent=1 // loop_pre_header
      _
    $region3: #{tpu_custom_call.1} parent=1 // loop_header
      %s11 = sphi 0, %s15
      %p12 = scmp.ge.s32.totalorder %s11, 4
      %s18 = sphi 0, %s30
      %s19 = sphi 0, %s26
      %s20 = sphi 0, %s18
      %s21 = sphi 0, %s19
      %s22 = sphi 0, %s20
      %s23 = sphi 0, %s21
      %s31 = sphi 0, %s31
      %s33 = sphi 0, %s31
      %s34 = sphi 0, %s33
      %s48 = sphi 0, %s34
      %s52 = sphi 0, %s52
      %s54 = sphi 0, %s52
      %s55 = sphi 0, %s54
      %s69 = sphi 0, %s55
      %s77 = sphi 0, %s79
      %s80 = sphi 0, %s77
      %s81 = sphi 0, %s80
      %s97 = sphi 0, %s81
    $region4: #{tpu_custom_call.1} parent=1 // loop_header_branch
      %14 = sbr.rel (%p12) target = $region8
    $region5: #{tpu_custom_call.1} parent=1 // loop_body
      %s16 = ssub.s32 %s11, 1
      %s17 = ssub.s32 %s11, 2
      %s24 = sadd.s32 1, %s19
      %p25 = scmp.ge.s32.totalorder %s24, 1
      %s26 = scalar_select %p25, 0, %s24
      %s27 = sadd.s32 1, %s18
      %s28 = scalar_select %p25, %s27, %s18
      %p29 = scmp.ge.s32.totalorder %s28, 2
      %s30 = scalar_select %p29, 0, %s28
      %s32 = sadd.s32 %s31, 1
      %p35 = scmp.eq.s32.totalorder %s11, 1
      %p36 = scmp.ne.s32.totalorder %s31, %s33
      %p37 = scmp.eq.s32.totalorder %s11, 0
      %p38 = por %p36, %p37
      %p39 = scmp.ne.s32.totalorder %s31, %s33
      %p40 = scmp.eq.s32.totalorder %s16, 1
      %p41 = por %p39, %p40
      %p42 = scmp.ne.s32.totalorder %s33, %s34
      %p43 = scmp.eq.s32.totalorder %s16, 0
      %p44 = por %p42, %p43
      %p45 = scmp.ne.s32.totalorder %s33, %s34
      %p46 = scmp.eq.s32.totalorder %s17, 1
      %p47 = por %p45, %p46
      %p49 = scmp.ne.s32.totalorder %s34, %s48
      %p50 = scmp.eq.s32.totalorder %s17, 0
      %p51 = por %p49, %p50
      %s53 = sadd.s32 %s52, 1
      %p56 = scmp.eq.s32.totalorder %s11, 1
      %p57 = scmp.ne.s32.totalorder %s52, %s54
      %p58 = scmp.eq.s32.totalorder %s11, 0
      %p59 = por %p57, %p58
      %p60 = scmp.ne.s32.totalorder %s52, %s54
      %p61 = scmp.eq.s32.totalorder %s16, 1
      %p62 = por %p60, %p61
      %p63 = scmp.ne.s32.totalorder %s54, %s55
      %p64 = scmp.eq.s32.totalorder %s16, 0
      %p65 = por %p63, %p64
      %p66 = scmp.ne.s32.totalorder %s54, %s55
      %p67 = scmp.eq.s32.totalorder %s17, 1
      %p68 = por %p66, %p67
      %p70 = scmp.ne.s32.totalorder %s55, %s69
      %p71 = scmp.eq.s32.totalorder %s17, 0
      %p72 = por %p70, %p71
      %s73 = ssub.s32 %s18, %s30
      %s74 = ssub.s32 %s19, %s26
      %s75 = sor.u32 %s73, %s74
      %p76 = scmp.eq.s32.totalorder %s75, 0
      %s78 = sadd.s32 %s77, 1
      %s79 = scalar_select %p76, %s77, %s78
      %p82 = pneg %p76
      %p83 = scmp.eq.s32.totalorder %s11, 1
      %p84 = por %p82, %p83
      %p85 = scmp.ne.s32.totalorder %s77, %s80
      %p86 = scmp.eq.s32.totalorder %s11, 0
      %p87 = por %p85, %p86
      %p88 = scmp.ne.s32.totalorder %s77, %s80
      %p89 = scmp.eq.s32.totalorder %s16, 1
      %p90 = por %p88, %p89
      %p91 = scmp.ne.s32.totalorder %s80, %s81
      %p92 = scmp.eq.s32.totalorder %s16, 0
      %p93 = por %p91, %p92
      %p94 = scmp.ne.s32.totalorder %s80, %s81
      %p95 = scmp.eq.s32.totalorder %s17, 1
      %p96 = por %p94, %p95
      %p98 = scmp.ne.s32.totalorder %s81, %s97
      %p99 = scmp.eq.s32.totalorder %s17, 0
      %p100 = por %p98, %p99
      %p101 = scmp.le.s32.totalorder 1, %s11
      %p102 = scmp.lt.s32.totalorder %s11, 3
      %p103 = pnand %p101, %p102
      %p104 = pneg %p103
      // Predicated region
      $region9: #{tpu_custom_call.1} parent=5 // pred_check
        _
      $region10: #{tpu_custom_call.1} parent=5 // pred_check_branch
        %106 = sbr.rel (%p103) target = $region12
      $region11: #{tpu_custom_call.1} parent=5 // pred_region
        %s107 = ssub.s32 %s11, 1
        // Predicated region
        $region13: #{tpu_custom_call.1} parent=11 // pred_check
          %p108 = pneg %p44
        $region14: #{tpu_custom_call.1} parent=11 // pred_check_branch
          %110 = sbr.rel (%p108) target = $region16
        $region15: #{tpu_custom_call.1} parent=11 // pred_region
          _
        $region16: #{tpu_custom_call.1} parent=11 // pred_fallthru
          _
        // Predicated region
        $region17: #{tpu_custom_call.1} parent=11 // pred_check
          %p111 = pneg %p65
        $region18: #{tpu_custom_call.1} parent=11 // pred_check_branch
          %113 = sbr.rel (%p111) target = $region20
        $region19: #{tpu_custom_call.1} parent=11 // pred_region
          _
        $region20: #{tpu_custom_call.1} parent=11 // pred_fallthru
          _
      $region12: #{tpu_custom_call.1} parent=5 // pred_fallthru
        _
      %p114 = scmp.lt.s32.totalorder %s11, 2
      // Predicated region
      $region21: #{tpu_custom_call.1} parent=5 // pred_check
        %p115 = pneg %p114
      $region22: #{tpu_custom_call.1} parent=5 // pred_check_branch
        %117 = sbr.rel (%p115) target = $region24
      $region23: #{tpu_custom_call.1} parent=5 // pred_region
        _
      $region24: #{tpu_custom_call.1} parent=5 // pred_fallthru
        _
      %p118 = scmp.le.s32.totalorder 1, %s11
      %p119 = scmp.lt.s32.totalorder %s11, 3
      %p120 = pnand %p118, %p119
      %p121 = pneg %p120
      // Predicated region
      $region25: #{tpu_custom_call.1} parent=5 // pred_check
        _
      $region26: #{tpu_custom_call.1} parent=5 // pred_check_branch
        %123 = sbr.rel (%p120) target = $region28
      $region27: #{tpu_custom_call.1} parent=5 // pred_region
        %s124 = ssub.s32 %s11, 1
        %p125 = pneg %p44
        %p126 = pneg %p41
        %p127 = pneg %p65
        %p128 = pneg %p62
        %p129 = pneg %p93
        %p130 = pneg %p90
        %s131 = sand.u32 %s80, 1
        %s132 = scalar_lea.sflag [#allocation3], %s131
        %s133 = sand.u32 %s80, 1
        %s134 = smul.addr %s133, 64
        %s135 = scalar_lea.vmem [#allocation2], %s134
        %s136 = smul.u32 4, %s20
        %s137 = smul.u32 2, %s21
        %p138 = scmp.eq.s32.totalorder %s20, 0
        // Predicated region
        $region29: #{tpu_custom_call.1} parent=27 // pred_check
          %p139 = pneg %p138
        $region30: #{tpu_custom_call.1} parent=27 // pred_check_branch
          %141 = sbr.rel (%p139) target = $region32
        $region31: #{tpu_custom_call.1} parent=27 // pred_region
          %v142 = vlaneseq
          %v143 = vand.u32 %v142, 127
          %v144 = vadd.s32 %v143, 128
          %v145 = vcvt.s32.f32 %v143
          %v146 = vcvt.s32.f32 %v144
          %v147 = vlaneseq
          %v148 = vshrl.u32 %v147, 7
          %v149 = vadd.s32 %v148, 8
          %v150 = vcvt.s32.f32 %v148
          %v151 = vcvt.s32.f32 %v149
          %v152 = vrcp.pop 16.0
          %v153 = vmul.f32 16.0, %v152
          %v154 = vsub.f32 1.0, %v153
          %v155 = vmul.f32 %v152, %v154
          %v156 = vadd.f32 %v152, %v155
          %vm157 = vweird.f32 %v152
          %v158 = vsel %vm157, %v152, %v156
          %v159 = vmul.f32 %v145, %v158
          %v160 = vmul.f32 %v146, %v158
          %v161 = vfloor.f32 %v159
          %v162 = vfloor.f32 %v160
          %v163 = vmul.f32 %v161, 16.0
          %v164 = vmul.f32 %v162, 16.0
          %v165 = vsub.f32 %v145, %v163
          %v166 = vsub.f32 %v146, %v164
          %vm167 = vcmp.eq.f32.partialorder %v165, %v150
          %vm168 = vcmp.eq.f32.partialorder %v166, %v150
          %vm169 = vcmp.eq.f32.partialorder %v165, %v151
          %vm170 = vcmp.eq.f32.partialorder %v166, %v151
          %v171 = vsel %vm167, 1, 0
          %v172 = vsel %vm168, 1, 0
          %v173 = vsel %vm169, 1, 0
          %v174 = vsel %vm170, 1, 0
          %v175 = vcvt.s32.f32 %v171
          %v176 = vcvt.s32.f32 %v172
          %v177 = vcvt.s32.f32 %v173
          %v178 = vcvt.s32.f32 %v174
          %v179 = vld [vmem:[%s0] sm:$0xff]
          %v180 = vld [vmem:[%s0 + $0x8] sm:$0xff]
          %v181 = vld [vmem:[%s0 + $0x10] sm:$0xff]
          %v182 = vld [vmem:[%s0 + $0x18] sm:$0xff]
          %vm183 = vcmask 130048
          %v185 = vsel %vm183, %v179, 0
          %v188 = vsel %vm183, %v180, 0
          %v191 = vsel %vm183, %v181, 0
          %v194 = vsel %vm183, %v182, 0
          %196 = vmatpush.msra.mxu0 0.0
          %197 = vmatpush.msra.mxu0 0.0
          %198 = vmatpush.msra.mxu0 0.0
          %199 = vmatpush.msra.mxu0 0.0
          %200 = vmatpush.msra.mxu0 0.0
          %201 = vmatpush.msra.mxu0 0.0
          %202 = vmatpush.msra.mxu0 0.0
          %203 = vmatpush.msra.mxu0 0.0
          %204 = vmatpush.msra.mxu0 0.0
          %205 = vmatpush.msra.mxu0 0.0
          %206 = vmatpush.msra.mxu0 0.0
          %207 = vmatpush.msra.mxu0 0.0
          %208 = vmatpush.msra.mxu0 0.0
          %209 = vmatpush.msra.mxu0 0.0
          %v210 = vand.u32 %v177, 4294901760
          %211 = vmatpush.msra.mxu0 %v210
          %v212 = vand.u32 %v175, 4294901760
          %213 = vmatpush.msra.mxu0 %v212
          %v214 = vand.u32 %v185, 4294901760
          %v215 = vsub.f32 %v185, %v214
          %v216 = vand.u32 %v215, 4294901760
          %v217 = vsub.f32 %v215, %v216
          %v218 = vand.u32 %v217, 4294901760
          %219 = vmatmul.f32.gmra.mxu0 %v218
          %v220 = vpop.f32.mrf.mxu0
          %v221 = vadd.f32 0.0, %v220
          %v222 = vand.u32 %v188, 4294901760
          %v223 = vsub.f32 %v188, %v222
          %v224 = vand.u32 %v223, 4294901760
          %v225 = vsub.f32 %v223, %v224
          %v226 = vand.u32 %v225, 4294901760
          %227 = vmatmul.f32.gmra.mxu0 %v226
          %v228 = vpop.f32.mrf.mxu0
          %v229 = vadd.f32 0.0, %v228
          %v230 = vand.u32 %v191, 4294901760
          %v231 = vsub.f32 %v191, %v230
          %v232 = vand.u32 %v231, 4294901760
          %v233 = vsub.f32 %v231, %v232
          %v234 = vand.u32 %v233, 4294901760
          %235 = vmatmul.f32.gmra.mxu0 %v234
          %v236 = vpop.f32.mrf.mxu0
          %v237 = vadd.f32 0.0, %v236
          %v238 = vand.u32 %v194, 4294901760
          %v239 = vsub.f32 %v194, %v238
          %v240 = vand.u32 %v239, 4294901760
          %v241 = vsub.f32 %v239, %v240
          %v242 = vand.u32 %v241, 4294901760
          %243 = vmatmul.f32.gmra.mxu0 %v242
          %v244 = vpop.f32.mrf.mxu0
          %v245 = vadd.f32 0.0, %v244
          %246 = vdwg.mxu0
          %247 = vmatpush.msra.mxu0 0.0
          %248 = vmatpush.msra.mxu0 0.0
          %249 = vmatpush.msra.mxu0 0.0
          %250 = vmatpush.msra.mxu0 0.0
          %251 = vmatpush.msra.mxu0 0.0
          %252 = vmatpush.msra.mxu0 0.0
          %253 = vmatpush.msra.mxu0 0.0
          %254 = vmatpush.msra.mxu0 0.0
          %255 = vmatpush.msra.mxu0 0.0
          %256 = vmatpush.msra.mxu0 0.0
          %257 = vmatpush.msra.mxu0 0.0
          %258 = vmatpush.msra.mxu0 0.0
          %259 = vmatpush.msra.mxu0 0.0
          %260 = vmatpush.msra.mxu0 0.0
          %v261 = vand.u32 %v177, 4294901760
          %v262 = vsub.f32 %v177, %v261
          %v263 = vand.u32 %v262, 4294901760
          %v264 = vsub.f32 %v262, %v263
          %v265 = vand.u32 %v264, 4294901760
          %266 = vmatpush.msra.mxu0 %v265
          %v267 = vand.u32 %v175, 4294901760
          %v268 = vsub.f32 %v175, %v267
          %v269 = vand.u32 %v268, 4294901760
          %v270 = vsub.f32 %v268, %v269
          %v271 = vand.u32 %v270, 4294901760
          %272 = vmatpush.msra.mxu0 %v271
          %v273 = vand.u32 %v185, 4294901760
          %274 = vmatmul.f32.gmra.mxu0 %v273
          %v275 = vpop.f32.mrf.mxu0
          %v276 = vadd.f32 %v221, %v275
          %v277 = vand.u32 %v188, 4294901760
          %278 = vmatmul.f32.gmra.mxu0 %v277
          %v279 = vpop.f32.mrf.mxu0
          %v280 = vadd.f32 %v229, %v279
          %v281 = vand.u32 %v191, 4294901760
          %282 = vmatmul.f32.gmra.mxu0 %v281
          %v283 = vpop.f32.mrf.mxu0
          %v284 = vadd.f32 %v237, %v283
          %v285 = vand.u32 %v194, 4294901760
          %286 = vmatmul.f32.gmra.mxu0 %v285
          %v287 = vpop.f32.mrf.mxu0
          %v288 = vadd.f32 %v245, %v287
          %289 = vdwg.mxu0
          %290 = vmatpush.msra.mxu0 0.0
          %291 = vmatpush.msra.mxu0 0.0
          %292 = vmatpush.msra.mxu0 0.0
          %293 = vmatpush.msra.mxu0 0.0
          %294 = vmatpush.msra.mxu0 0.0
          %295 = vmatpush.msra.mxu0 0.0
          %296 = vmatpush.msra.mxu0 0.0
          %297 = vmatpush.msra.mxu0 0.0
          %298 = vmatpush.msra.mxu0 0.0
          %299 = vmatpush.msra.mxu0 0.0
          %300 = vmatpush.msra.mxu0 0.0
          %301 = vmatpush.msra.mxu0 0.0
          %302 = vmatpush.msra.mxu0 0.0
          %303 = vmatpush.msra.mxu0 0.0
          %v304 = vand.u32 %v177, 4294901760
          %v305 = vsub.f32 %v177, %v304
          %306 = vmatpush.msra.mxu0 %v305
          %v307 = vand.u32 %v175, 4294901760
          %v308 = vsub.f32 %v175, %v307
          %309 = vmatpush.msra.mxu0 %v308
          %v310 = vand.u32 %v185, 4294901760
          %v311 = vsub.f32 %v185, %v310
          %312 = vmatmul.f32.gmra.mxu0 %v311
          %v313 = vpop.f32.mrf.mxu0
          %v314 = vadd.f32 %v276, %v313
          %v315 = vand.u32 %v188, 4294901760
          %v316 = vsub.f32 %v188, %v315
          %317 = vmatmul.f32.gmra.mxu0 %v316
          %v318 = vpop.f32.mrf.mxu0
          %v319 = vadd.f32 %v280, %v318
          %v320 = vand.u32 %v191, 4294901760
          %v321 = vsub.f32 %v191, %v320
          %322 = vmatmul.f32.gmra.mxu0 %v321
          %v323 = vpop.f32.mrf.mxu0
          %v324 = vadd.f32 %v284, %v323
          %v325 = vand.u32 %v194, 4294901760
          %v326 = vsub.f32 %v194, %v325
          %327 = vmatmul.f32.gmra.mxu0 %v326
          %v328 = vpop.f32.mrf.mxu0
          %v329 = vadd.f32 %v288, %v328
          %330 = vdwg.mxu0
          %331 = vmatpush.msra.mxu0 0.0
          %332 = vmatpush.msra.mxu0 0.0
          %333 = vmatpush.msra.mxu0 0.0
          %334 = vmatpush.msra.mxu0 0.0
          %335 = vmatpush.msra.mxu0 0.0
          %336 = vmatpush.msra.mxu0 0.0
          %337 = vmatpush.msra.mxu0 0.0
          %338 = vmatpush.msra.mxu0 0.0
          %339 = vmatpush.msra.mxu0 0.0
          %340 = vmatpush.msra.mxu0 0.0
          %341 = vmatpush.msra.mxu0 0.0
          %342 = vmatpush.msra.mxu0 0.0
          %343 = vmatpush.msra.mxu0 0.0
          %344 = vmatpush.msra.mxu0 0.0
          %v345 = vand.u32 %v177, 4294901760
          %346 = vmatpush.msra.mxu0 %v345
          %v347 = vand.u32 %v175, 4294901760
          %348 = vmatpush.msra.mxu0 %v347
          %v349 = vand.u32 %v185, 4294901760
          %v350 = vsub.f32 %v185, %v349
          %v351 = vand.u32 %v350, 4294901760
          %352 = vmatmul.f32.gmra.mxu0 %v351
          %v353 = vpop.f32.mrf.mxu0
          %v354 = vadd.f32 %v314, %v353
          %v355 = vand.u32 %v188, 4294901760
          %v356 = vsub.f32 %v188, %v355
          %v357 = vand.u32 %v356, 4294901760
          %358 = vmatmul.f32.gmra.mxu0 %v357
          %v359 = vpop.f32.mrf.mxu0
          %v360 = vadd.f32 %v319, %v359
          %v361 = vand.u32 %v191, 4294901760
          %v362 = vsub.f32 %v191, %v361
          %v363 = vand.u32 %v362, 4294901760
          %364 = vmatmul.f32.gmra.mxu0 %v363
          %v365 = vpop.f32.mrf.mxu0
          %v366 = vadd.f32 %v324, %v365
          %v367 = vand.u32 %v194, 4294901760
          %v368 = vsub.f32 %v194, %v367
          %v369 = vand.u32 %v368, 4294901760
          %370 = vmatmul.f32.gmra.mxu0 %v369
          %v371 = vpop.f32.mrf.mxu0
          %v372 = vadd.f32 %v329, %v371
          %373 = vdwg.mxu0
          %374 = vmatpush.msra.mxu0 0.0
          %375 = vmatpush.msra.mxu0 0.0
          %376 = vmatpush.msra.mxu0 0.0
          %377 = vmatpush.msra.mxu0 0.0
          %378 = vmatpush.msra.mxu0 0.0
          %379 = vmatpush.msra.mxu0 0.0
          %380 = vmatpush.msra.mxu0 0.0
          %381 = vmatpush.msra.mxu0 0.0
          %382 = vmatpush.msra.mxu0 0.0
          %383 = vmatpush.msra.mxu0 0.0
          %384 = vmatpush.msra.mxu0 0.0
          %385 = vmatpush.msra.mxu0 0.0
          %386 = vmatpush.msra.mxu0 0.0
          %387 = vmatpush.msra.mxu0 0.0
          %v388 = vand.u32 %v177, 4294901760
          %v389 = vsub.f32 %v177, %v388
          %v390 = vand.u32 %v389, 4294901760
          %391 = vmatpush.msra.mxu0 %v390
          %v392 = vand.u32 %v175, 4294901760
          %v393 = vsub.f32 %v175, %v392
          %v394 = vand.u32 %v393, 4294901760
          %395 = vmatpush.msra.mxu0 %v394
          %v396 = vand.u32 %v185, 4294901760
          %397 = vmatmul.f32.gmra.mxu0 %v396
          %v398 = vpop.f32.mrf.mxu0
          %v399 = vadd.f32 %v354, %v398
          %v400 = vand.u32 %v188, 4294901760
          %401 = vmatmul.f32.gmra.mxu0 %v400
          %v402 = vpop.f32.mrf.mxu0
          %v403 = vadd.f32 %v360, %v402
          %v404 = vand.u32 %v191, 4294901760
          %405 = vmatmul.f32.gmra.mxu0 %v404
          %v406 = vpop.f32.mrf.mxu0
          %v407 = vadd.f32 %v366, %v406
          %v408 = vand.u32 %v194, 4294901760
          %409 = vmatmul.f32.gmra.mxu0 %v408
          %v410 = vpop.f32.mrf.mxu0
          %v411 = vadd.f32 %v372, %v410
          %412 = vdwg.mxu0
          %413 = vmatpush.msra.mxu0 0.0
          %414 = vmatpush.msra.mxu0 0.0
          %415 = vmatpush.msra.mxu0 0.0
          %416 = vmatpush.msra.mxu0 0.0
          %417 = vmatpush.msra.mxu0 0.0
          %418 = vmatpush.msra.mxu0 0.0
          %419 = vmatpush.msra.mxu0 0.0
          %420 = vmatpush.msra.mxu0 0.0
          %421 = vmatpush.msra.mxu0 0.0
          %422 = vmatpush.msra.mxu0 0.0
          %423 = vmatpush.msra.mxu0 0.0
          %424 = vmatpush.msra.mxu0 0.0
          %425 = vmatpush.msra.mxu0 0.0
          %426 = vmatpush.msra.mxu0 0.0
          %v427 = vand.u32 %v177, 4294901760
          %428 = vmatpush.msra.mxu0 %v427
          %v429 = vand.u32 %v175, 4294901760
          %430 = vmatpush.msra.mxu0 %v429
          %v431 = vand.u32 %v185, 4294901760
          %432 = vmatmul.f32.gmra.mxu0 %v431
          %v433 = vpop.f32.mrf.mxu0
          %v434 = vadd.f32 %v399, %v433
          %v435 = vand.u32 %v188, 4294901760
          %436 = vmatmul.f32.gmra.mxu0 %v435
          %v437 = vpop.f32.mrf.mxu0
          %v438 = vadd.f32 %v403, %v437
          %v439 = vand.u32 %v191, 4294901760
          %440 = vmatmul.f32.gmra.mxu0 %v439
          %v441 = vpop.f32.mrf.mxu0
          %v442 = vadd.f32 %v407, %v441
          %v443 = vand.u32 %v194, 4294901760
          %444 = vmatmul.f32.gmra.mxu0 %v443
          %v445 = vpop.f32.mrf.mxu0
          %v446 = vadd.f32 %v411, %v445
          %447 = vdwg.mxu0
          %448 = vmatpush.msra.mxu0 0.0
          %449 = vmatpush.msra.mxu0 0.0
          %450 = vmatpush.msra.mxu0 0.0
          %451 = vmatpush.msra.mxu0 0.0
          %452 = vmatpush.msra.mxu0 0.0
          %453 = vmatpush.msra.mxu0 0.0
          %454 = vmatpush.msra.mxu0 0.0
          %455 = vmatpush.msra.mxu0 0.0
          %456 = vmatpush.msra.mxu0 0.0
          %457 = vmatpush.msra.mxu0 0.0
          %458 = vmatpush.msra.mxu0 0.0
          %459 = vmatpush.msra.mxu0 0.0
          %460 = vmatpush.msra.mxu0 0.0
          %461 = vmatpush.msra.mxu0 0.0
          %v462 = vand.u32 %v178, 4294901760
          %463 = vmatpush.msra.mxu0 %v462
          %v464 = vand.u32 %v176, 4294901760
          %465 = vmatpush.msra.mxu0 %v464
          %v466 = vand.u32 %v185, 4294901760
          %v467 = vsub.f32 %v185, %v466
          %v468 = vand.u32 %v467, 4294901760
          %v469 = vsub.f32 %v467, %v468
          %v470 = vand.u32 %v469, 4294901760
          %471 = vmatmul.f32.gmra.mxu0 %v470
          %v472 = vpop.f32.mrf.mxu0
          %v473 = vadd.f32 0.0, %v472
          %v474 = vand.u32 %v188, 4294901760
          %v475 = vsub.f32 %v188, %v474
          %v476 = vand.u32 %v475, 4294901760
          %v477 = vsub.f32 %v475, %v476
          %v478 = vand.u32 %v477, 4294901760
          %479 = vmatmul.f32.gmra.mxu0 %v478
          %v480 = vpop.f32.mrf.mxu0
          %v481 = vadd.f32 0.0, %v480
          %v482 = vand.u32 %v191, 4294901760
          %v483 = vsub.f32 %v191, %v482
          %v484 = vand.u32 %v483, 4294901760
          %v485 = vsub.f32 %v483, %v484
          %v486 = vand.u32 %v485, 4294901760
          %487 = vmatmul.f32.gmra.mxu0 %v486
          %v488 = vpop.f32.mrf.mxu0
          %v489 = vadd.f32 0.0, %v488
          %v490 = vand.u32 %v194, 4294901760
          %v491 = vsub.f32 %v194, %v490
          %v492 = vand.u32 %v491, 4294901760
          %v493 = vsub.f32 %v491, %v492
          %v494 = vand.u32 %v493, 4294901760
          %495 = vmatmul.f32.gmra.mxu0 %v494
          %v496 = vpop.f32.mrf.mxu0
          %v497 = vadd.f32 0.0, %v496
          %498 = vdwg.mxu0
          %499 = vmatpush.msra.mxu0 0.0
          %500 = vmatpush.msra.mxu0 0.0
          %501 = vmatpush.msra.mxu0 0.0
          %502 = vmatpush.msra.mxu0 0.0
          %503 = vmatpush.msra.mxu0 0.0
          %504 = vmatpush.msra.mxu0 0.0
          %505 = vmatpush.msra.mxu0 0.0
          %506 = vmatpush.msra.mxu0 0.0
          %507 = vmatpush.msra.mxu0 0.0
          %508 = vmatpush.msra.mxu0 0.0
          %509 = vmatpush.msra.mxu0 0.0
          %510 = vmatpush.msra.mxu0 0.0
          %511 = vmatpush.msra.mxu0 0.0
          %512 = vmatpush.msra.mxu0 0.0
          %v513 = vand.u32 %v178, 4294901760
          %v514 = vsub.f32 %v178, %v513
          %v515 = vand.u32 %v514, 4294901760
          %v516 = vsub.f32 %v514, %v515
          %v517 = vand.u32 %v516, 4294901760
          %518 = vmatpush.msra.mxu0 %v517
          %v519 = vand.u32 %v176, 4294901760
          %v520 = vsub.f32 %v176, %v519
          %v521 = vand.u32 %v520, 4294901760
          %v522 = vsub.f32 %v520, %v521
          %v523 = vand.u32 %v522, 4294901760
          %524 = vmatpush.msra.mxu0 %v523
          %v525 = vand.u32 %v185, 4294901760
          %526 = vmatmul.f32.gmra.mxu0 %v525
          %v527 = vpop.f32.mrf.mxu0
          %v528 = vadd.f32 %v473, %v527
          %v529 = vand.u32 %v188, 4294901760
          %530 = vmatmul.f32.gmra.mxu0 %v529
          %v531 = vpop.f32.mrf.mxu0
          %v532 = vadd.f32 %v481, %v531
          %v533 = vand.u32 %v191, 4294901760
          %534 = vmatmul.f32.gmra.mxu0 %v533
          %v535 = vpop.f32.mrf.mxu0
          %v536 = vadd.f32 %v489, %v535
          %v537 = vand.u32 %v194, 4294901760
          %538 = vmatmul.f32.gmra.mxu0 %v537
          %v539 = vpop.f32.mrf.mxu0
          %v540 = vadd.f32 %v497, %v539
          %541 = vdwg.mxu0
          %542 = vmatpush.msra.mxu0 0.0
          %543 = vmatpush.msra.mxu0 0.0
          %544 = vmatpush.msra.mxu0 0.0
          %545 = vmatpush.msra.mxu0 0.0
          %546 = vmatpush.msra.mxu0 0.0
          %547 = vmatpush.msra.mxu0 0.0
          %548 = vmatpush.msra.mxu0 0.0
          %549 = vmatpush.msra.mxu0 0.0
          %550 = vmatpush.msra.mxu0 0.0
          %551 = vmatpush.msra.mxu0 0.0
          %552 = vmatpush.msra.mxu0 0.0
          %553 = vmatpush.msra.mxu0 0.0
          %554 = vmatpush.msra.mxu0 0.0
          %555 = vmatpush.msra.mxu0 0.0
          %v556 = vand.u32 %v178, 4294901760
          %v557 = vsub.f32 %v178, %v556
          %558 = vmatpush.msra.mxu0 %v557
          %v559 = vand.u32 %v176, 4294901760
          %v560 = vsub.f32 %v176, %v559
          %561 = vmatpush.msra.mxu0 %v560
          %v562 = vand.u32 %v185, 4294901760
          %v563 = vsub.f32 %v185, %v562
          %564 = vmatmul.f32.gmra.mxu0 %v563
          %v565 = vpop.f32.mrf.mxu0
          %v566 = vadd.f32 %v528, %v565
          %v567 = vand.u32 %v188, 4294901760
          %v568 = vsub.f32 %v188, %v567
          %569 = vmatmul.f32.gmra.mxu0 %v568
          %v570 = vpop.f32.mrf.mxu0
          %v571 = vadd.f32 %v532, %v570
          %v572 = vand.u32 %v191, 4294901760
          %v573 = vsub.f32 %v191, %v572
          %574 = vmatmul.f32.gmra.mxu0 %v573
          %v575 = vpop.f32.mrf.mxu0
          %v576 = vadd.f32 %v536, %v575
          %v577 = vand.u32 %v194, 4294901760
          %v578 = vsub.f32 %v194, %v577
          %579 = vmatmul.f32.gmra.mxu0 %v578
          %v580 = vpop.f32.mrf.mxu0
          %v581 = vadd.f32 %v540, %v580
          %582 = vdwg.mxu0
          %583 = vmatpush.msra.mxu0 0.0
          %584 = vmatpush.msra.mxu0 0.0
          %585 = vmatpush.msra.mxu0 0.0
          %586 = vmatpush.msra.mxu0 0.0
          %587 = vmatpush.msra.mxu0 0.0
          %588 = vmatpush.msra.mxu0 0.0
          %589 = vmatpush.msra.mxu0 0.0
          %590 = vmatpush.msra.mxu0 0.0
          %591 = vmatpush.msra.mxu0 0.0
          %592 = vmatpush.msra.mxu0 0.0
          %593 = vmatpush.msra.mxu0 0.0
          %594 = vmatpush.msra.mxu0 0.0
          %595 = vmatpush.msra.mxu0 0.0
          %596 = vmatpush.msra.mxu0 0.0
          %v597 = vand.u32 %v178, 4294901760
          %598 = vmatpush.msra.mxu0 %v597
          %v599 = vand.u32 %v176, 4294901760
          %600 = vmatpush.msra.mxu0 %v599
          %v601 = vand.u32 %v185, 4294901760
          %v602 = vsub.f32 %v185, %v601
          %v603 = vand.u32 %v602, 4294901760
          %604 = vmatmul.f32.gmra.mxu0 %v603
          %v605 = vpop.f32.mrf.mxu0
          %v606 = vadd.f32 %v566, %v605
          %v607 = vand.u32 %v188, 4294901760
          %v608 = vsub.f32 %v188, %v607
          %v609 = vand.u32 %v608, 4294901760
          %610 = vmatmul.f32.gmra.mxu0 %v609
          %v611 = vpop.f32.mrf.mxu0
          %v612 = vadd.f32 %v571, %v611
          %v613 = vand.u32 %v191, 4294901760
          %v614 = vsub.f32 %v191, %v613
          %v615 = vand.u32 %v614, 4294901760
          %616 = vmatmul.f32.gmra.mxu0 %v615
          %v617 = vpop.f32.mrf.mxu0
          %v618 = vadd.f32 %v576, %v617
          %v619 = vand.u32 %v194, 4294901760
          %v620 = vsub.f32 %v194, %v619
          %v621 = vand.u32 %v620, 4294901760
          %622 = vmatmul.f32.gmra.mxu0 %v621
          %v623 = vpop.f32.mrf.mxu0
          %v624 = vadd.f32 %v581, %v623
          %625 = vdwg.mxu0
          %626 = vmatpush.msra.mxu0 0.0
          %627 = vmatpush.msra.mxu0 0.0
          %628 = vmatpush.msra.mxu0 0.0
          %629 = vmatpush.msra.mxu0 0.0
          %630 = vmatpush.msra.mxu0 0.0
          %631 = vmatpush.msra.mxu0 0.0
          %632 = vmatpush.msra.mxu0 0.0
          %633 = vmatpush.msra.mxu0 0.0
          %634 = vmatpush.msra.mxu0 0.0
          %635 = vmatpush.msra.mxu0 0.0
          %636 = vmatpush.msra.mxu0 0.0
          %637 = vmatpush.msra.mxu0 0.0
          %638 = vmatpush.msra.mxu0 0.0
          %639 = vmatpush.msra.mxu0 0.0
          %v640 = vand.u32 %v178, 4294901760
          %v641 = vsub.f32 %v178, %v640
          %v642 = vand.u32 %v641, 4294901760
          %643 = vmatpush.msra.mxu0 %v642
          %v644 = vand.u32 %v176, 4294901760
          %v645 = vsub.f32 %v176, %v644
          %v646 = vand.u32 %v645, 4294901760
          %647 = vmatpush.msra.mxu0 %v646
          %v648 = vand.u32 %v185, 4294901760
          %649 = vmatmul.f32.gmra.mxu0 %v648
          %v650 = vpop.f32.mrf.mxu0
          %v651 = vadd.f32 %v606, %v650
          %v652 = vand.u32 %v188, 4294901760
          %653 = vmatmul.f32.gmra.mxu0 %v652
          %v654 = vpop.f32.mrf.mxu0
          %v655 = vadd.f32 %v612, %v654
          %v656 = vand.u32 %v191, 4294901760
          %657 = vmatmul.f32.gmra.mxu0 %v656
          %v658 = vpop.f32.mrf.mxu0
          %v659 = vadd.f32 %v618, %v658
          %v660 = vand.u32 %v194, 4294901760
          %661 = vmatmul.f32.gmra.mxu0 %v660
          %v662 = vpop.f32.mrf.mxu0
          %v663 = vadd.f32 %v624, %v662
          %664 = vdwg.mxu0
          %665 = vmatpush.msra.mxu0 0.0
          %666 = vmatpush.msra.mxu0 0.0
          %667 = vmatpush.msra.mxu0 0.0
          %668 = vmatpush.msra.mxu0 0.0
          %669 = vmatpush.msra.mxu0 0.0
          %670 = vmatpush.msra.mxu0 0.0
          %671 = vmatpush.msra.mxu0 0.0
          %672 = vmatpush.msra.mxu0 0.0
          %673 = vmatpush.msra.mxu0 0.0
          %674 = vmatpush.msra.mxu0 0.0
          %675 = vmatpush.msra.mxu0 0.0
          %676 = vmatpush.msra.mxu0 0.0
          %677 = vmatpush.msra.mxu0 0.0
          %678 = vmatpush.msra.mxu0 0.0
          %v679 = vand.u32 %v178, 4294901760
          %680 = vmatpush.msra.mxu0 %v679
          %v681 = vand.u32 %v176, 4294901760
          %682 = vmatpush.msra.mxu0 %v681
          %v683 = vand.u32 %v185, 4294901760
          %684 = vmatmul.f32.gmra.mxu0 %v683
          %v685 = vpop.f32.mrf.mxu0
          %v686 = vadd.f32 %v651, %v685
          %v687 = vand.u32 %v188, 4294901760
          %688 = vmatmul.f32.gmra.mxu0 %v687
          %v689 = vpop.f32.mrf.mxu0
          %v690 = vadd.f32 %v655, %v689
          %v691 = vand.u32 %v191, 4294901760
          %692 = vmatmul.f32.gmra.mxu0 %v691
          %v693 = vpop.f32.mrf.mxu0
          %v694 = vadd.f32 %v659, %v693
          %v695 = vand.u32 %v194, 4294901760
          %696 = vmatmul.f32.gmra.mxu0 %v695
          %v697 = vpop.f32.mrf.mxu0
          %v698 = vadd.f32 %v663, %v697
          %699 = vdwg.mxu0
          %700 = vst [vmem:[%s135] sm:$0xff] %v434
          %701 = vst [vmem:[%s135 + $0x8] sm:$0xff] %v686
          %702 = vst [vmem:[%s135 + $0x10] sm:$0xff] %v438
          %703 = vst [vmem:[%s135 + $0x18] sm:$0xff] %v690
          %704 = vst [vmem:[%s135 + $0x20] sm:$0xff] %v442
          %705 = vst [vmem:[%s135 + $0x28] sm:$0xff] %v694
          %706 = vst [vmem:[%s135 + $0x30] sm:$0xff] %v446
          %707 = vst [vmem:[%s135 + $0x38] sm:$0xff] %v698
        $region32: #{tpu_custom_call.1} parent=27 // pred_fallthru
          _
        %p708 = scmp.eq.s32.totalorder %s20, 1
        // Predicated region
        $region33: #{tpu_custom_call.1} parent=27 // pred_check
          %p709 = pneg %p708
        $region34: #{tpu_custom_call.1} parent=27 // pred_check_branch
          %711 = sbr.rel (%p709) target = $region36
        $region35: #{tpu_custom_call.1} parent=27 // pred_region
          %v712 = vlaneseq
          %v713 = vand.u32 %v712, 127
          %v714 = vadd.s32 %v713, 128
          %v715 = vcvt.s32.f32 %v713
          %v716 = vcvt.s32.f32 %v714
          %v717 = vlaneseq
          %v718 = vshrl.u32 %v717, 7
          %v719 = vadd.s32 %v718, 8
          %v720 = vcvt.s32.f32 %v718
          %v721 = vcvt.s32.f32 %v719
          %v722 = vrcp.pop 16.0
          %v723 = vmul.f32 16.0, %v722
          %v724 = vsub.f32 1.0, %v723
          %v725 = vmul.f32 %v722, %v724
          %v726 = vadd.f32 %v722, %v725
          %vm727 = vweird.f32 %v722
          %v728 = vsel %vm727, %v722, %v726
          %v729 = vmul.f32 %v715, %v728
          %v730 = vmul.f32 %v716, %v728
          %v731 = vfloor.f32 %v729
          %v732 = vfloor.f32 %v730
          %s733 = smul.u32 %s21, 16
          %s734 = scvt.s32.f32 %s733
          %v735 = vstv %s734
          %v736 = vadd.f32 %v731, %v735
          %v737 = vadd.f32 %v732, %v735
          %vm738 = vcmp.eq.f32.partialorder %v736, %v720
          %vm739 = vcmp.eq.f32.partialorder %v737, %v720
          %vm740 = vcmp.eq.f32.partialorder %v736, %v721
          %vm741 = vcmp.eq.f32.partialorder %v737, %v721
          %v742 = vsel %vm738, 1, 0
          %v743 = vsel %vm739, 1, 0
          %v744 = vsel %vm740, 1, 0
          %v745 = vsel %vm741, 1, 0
          %v746 = vcvt.s32.f32 %v742
          %v747 = vcvt.s32.f32 %v743
          %v748 = vcvt.s32.f32 %v744
          %v749 = vcvt.s32.f32 %v745
          %v750 = vld [vmem:[%s1] sm:$0xff]
          %v751 = vld [vmem:[%s1 + $0x8] sm:$0xff]
          %v752 = vld [vmem:[%s1 + $0x10] sm:$0xff]
          %v753 = vld [vmem:[%s1 + $0x18] sm:$0xff]
          %vm754 = vcmask 130048
          %v756 = vsel %vm754, %v750, 0
          %v759 = vsel %vm754, %v751, 0
          %v762 = vsel %vm754, %v752, 0
          %v765 = vsel %vm754, %v753, 0
          %767 = vmatpush.msra.mxu0 0.0
          %768 = vmatpush.msra.mxu0 0.0
          %769 = vmatpush.msra.mxu0 0.0
          %770 = vmatpush.msra.mxu0 0.0
          %771 = vmatpush.msra.mxu0 0.0
          %772 = vmatpush.msra.mxu0 0.0
          %773 = vmatpush.msra.mxu0 0.0
          %774 = vmatpush.msra.mxu0 0.0
          %775 = vmatpush.msra.mxu0 0.0
          %776 = vmatpush.msra.mxu0 0.0
          %777 = vmatpush.msra.mxu0 0.0
          %778 = vmatpush.msra.mxu0 0.0
          %779 = vmatpush.msra.mxu0 0.0
          %780 = vmatpush.msra.mxu0 0.0
          %v781 = vand.u32 %v748, 4294901760
          %782 = vmatpush.msra.mxu0 %v781
          %v783 = vand.u32 %v746, 4294901760
          %784 = vmatpush.msra.mxu0 %v783
          %v785 = vand.u32 %v756, 4294901760
          %v786 = vsub.f32 %v756, %v785
          %v787 = vand.u32 %v786, 4294901760
          %v788 = vsub.f32 %v786, %v787
          %v789 = vand.u32 %v788, 4294901760
          %790 = vmatmul.f32.gmra.mxu0 %v789
          %v791 = vpop.f32.mrf.mxu0
          %v792 = vadd.f32 0.0, %v791
          %v793 = vand.u32 %v759, 4294901760
          %v794 = vsub.f32 %v759, %v793
          %v795 = vand.u32 %v794, 4294901760
          %v796 = vsub.f32 %v794, %v795
          %v797 = vand.u32 %v796, 4294901760
          %798 = vmatmul.f32.gmra.mxu0 %v797
          %v799 = vpop.f32.mrf.mxu0
          %v800 = vadd.f32 0.0, %v799
          %v801 = vand.u32 %v762, 4294901760
          %v802 = vsub.f32 %v762, %v801
          %v803 = vand.u32 %v802, 4294901760
          %v804 = vsub.f32 %v802, %v803
          %v805 = vand.u32 %v804, 4294901760
          %806 = vmatmul.f32.gmra.mxu0 %v805
          %v807 = vpop.f32.mrf.mxu0
          %v808 = vadd.f32 0.0, %v807
          %v809 = vand.u32 %v765, 4294901760
          %v810 = vsub.f32 %v765, %v809
          %v811 = vand.u32 %v810, 4294901760
          %v812 = vsub.f32 %v810, %v811
          %v813 = vand.u32 %v812, 4294901760
          %814 = vmatmul.f32.gmra.mxu0 %v813
          %v815 = vpop.f32.mrf.mxu0
          %v816 = vadd.f32 0.0, %v815
          %817 = vdwg.mxu0
          %818 = vmatpush.msra.mxu0 0.0
          %819 = vmatpush.msra.mxu0 0.0
          %820 = vmatpush.msra.mxu0 0.0
          %821 = vmatpush.msra.mxu0 0.0
          %822 = vmatpush.msra.mxu0 0.0
          %823 = vmatpush.msra.mxu0 0.0
          %824 = vmatpush.msra.mxu0 0.0
          %825 = vmatpush.msra.mxu0 0.0
          %826 = vmatpush.msra.mxu0 0.0
          %827 = vmatpush.msra.mxu0 0.0
          %828 = vmatpush.msra.mxu0 0.0
          %829 = vmatpush.msra.mxu0 0.0
          %830 = vmatpush.msra.mxu0 0.0
          %831 = vmatpush.msra.mxu0 0.0
          %v832 = vand.u32 %v748, 4294901760
          %v833 = vsub.f32 %v748, %v832
          %v834 = vand.u32 %v833, 4294901760
          %v835 = vsub.f32 %v833, %v834
          %v836 = vand.u32 %v835, 4294901760
          %837 = vmatpush.msra.mxu0 %v836
          %v838 = vand.u32 %v746, 4294901760
          %v839 = vsub.f32 %v746, %v838
          %v840 = vand.u32 %v839, 4294901760
          %v841 = vsub.f32 %v839, %v840
          %v842 = vand.u32 %v841, 4294901760
          %843 = vmatpush.msra.mxu0 %v842
          %v844 = vand.u32 %v756, 4294901760
          %845 = vmatmul.f32.gmra.mxu0 %v844
          %v846 = vpop.f32.mrf.mxu0
          %v847 = vadd.f32 %v792, %v846
          %v848 = vand.u32 %v759, 4294901760
          %849 = vmatmul.f32.gmra.mxu0 %v848
          %v850 = vpop.f32.mrf.mxu0
          %v851 = vadd.f32 %v800, %v850
          %v852 = vand.u32 %v762, 4294901760
          %853 = vmatmul.f32.gmra.mxu0 %v852
          %v854 = vpop.f32.mrf.mxu0
          %v855 = vadd.f32 %v808, %v854
          %v856 = vand.u32 %v765, 4294901760
          %857 = vmatmul.f32.gmra.mxu0 %v856
          %v858 = vpop.f32.mrf.mxu0
          %v859 = vadd.f32 %v816, %v858
          %860 = vdwg.mxu0
          %861 = vmatpush.msra.mxu0 0.0
          %862 = vmatpush.msra.mxu0 0.0
          %863 = vmatpush.msra.mxu0 0.0
          %864 = vmatpush.msra.mxu0 0.0
          %865 = vmatpush.msra.mxu0 0.0
          %866 = vmatpush.msra.mxu0 0.0
          %867 = vmatpush.msra.mxu0 0.0
          %868 = vmatpush.msra.mxu0 0.0
          %869 = vmatpush.msra.mxu0 0.0
          %870 = vmatpush.msra.mxu0 0.0
          %871 = vmatpush.msra.mxu0 0.0
          %872 = vmatpush.msra.mxu0 0.0
          %873 = vmatpush.msra.mxu0 0.0
          %874 = vmatpush.msra.mxu0 0.0
          %v875 = vand.u32 %v748, 4294901760
          %v876 = vsub.f32 %v748, %v875
          %877 = vmatpush.msra.mxu0 %v876
          %v878 = vand.u32 %v746, 4294901760
          %v879 = vsub.f32 %v746, %v878
          %880 = vmatpush.msra.mxu0 %v879
          %v881 = vand.u32 %v756, 4294901760
          %v882 = vsub.f32 %v756, %v881
          %883 = vmatmul.f32.gmra.mxu0 %v882
          %v884 = vpop.f32.mrf.mxu0
          %v885 = vadd.f32 %v847, %v884
          %v886 = vand.u32 %v759, 4294901760
          %v887 = vsub.f32 %v759, %v886
          %888 = vmatmul.f32.gmra.mxu0 %v887
          %v889 = vpop.f32.mrf.mxu0
          %v890 = vadd.f32 %v851, %v889
          %v891 = vand.u32 %v762, 4294901760
          %v892 = vsub.f32 %v762, %v891
          %893 = vmatmul.f32.gmra.mxu0 %v892
          %v894 = vpop.f32.mrf.mxu0
          %v895 = vadd.f32 %v855, %v894
          %v896 = vand.u32 %v765, 4294901760
          %v897 = vsub.f32 %v765, %v896
          %898 = vmatmul.f32.gmra.mxu0 %v897
          %v899 = vpop.f32.mrf.mxu0
          %v900 = vadd.f32 %v859, %v899
          %901 = vdwg.mxu0
          %902 = vmatpush.msra.mxu0 0.0
          %903 = vmatpush.msra.mxu0 0.0
          %904 = vmatpush.msra.mxu0 0.0
          %905 = vmatpush.msra.mxu0 0.0
          %906 = vmatpush.msra.mxu0 0.0
          %907 = vmatpush.msra.mxu0 0.0
          %908 = vmatpush.msra.mxu0 0.0
          %909 = vmatpush.msra.mxu0 0.0
          %910 = vmatpush.msra.mxu0 0.0
          %911 = vmatpush.msra.mxu0 0.0
          %912 = vmatpush.msra.mxu0 0.0
          %913 = vmatpush.msra.mxu0 0.0
          %914 = vmatpush.msra.mxu0 0.0
          %915 = vmatpush.msra.mxu0 0.0
          %v916 = vand.u32 %v748, 4294901760
          %917 = vmatpush.msra.mxu0 %v916
          %v918 = vand.u32 %v746, 4294901760
          %919 = vmatpush.msra.mxu0 %v918
          %v920 = vand.u32 %v756, 4294901760
          %v921 = vsub.f32 %v756, %v920
          %v922 = vand.u32 %v921, 4294901760
          %923 = vmatmul.f32.gmra.mxu0 %v922
          %v924 = vpop.f32.mrf.mxu0
          %v925 = vadd.f32 %v885, %v924
          %v926 = vand.u32 %v759, 4294901760
          %v927 = vsub.f32 %v759, %v926
          %v928 = vand.u32 %v927, 4294901760
          %929 = vmatmul.f32.gmra.mxu0 %v928
          %v930 = vpop.f32.mrf.mxu0
          %v931 = vadd.f32 %v890, %v930
          %v932 = vand.u32 %v762, 4294901760
          %v933 = vsub.f32 %v762, %v932
          %v934 = vand.u32 %v933, 4294901760
          %935 = vmatmul.f32.gmra.mxu0 %v934
          %v936 = vpop.f32.mrf.mxu0
          %v937 = vadd.f32 %v895, %v936
          %v938 = vand.u32 %v765, 4294901760
          %v939 = vsub.f32 %v765, %v938
          %v940 = vand.u32 %v939, 4294901760
          %941 = vmatmul.f32.gmra.mxu0 %v940
          %v942 = vpop.f32.mrf.mxu0
          %v943 = vadd.f32 %v900, %v942
          %944 = vdwg.mxu0
          %945 = vmatpush.msra.mxu0 0.0
          %946 = vmatpush.msra.mxu0 0.0
          %947 = vmatpush.msra.mxu0 0.0
          %948 = vmatpush.msra.mxu0 0.0
          %949 = vmatpush.msra.mxu0 0.0
          %950 = vmatpush.msra.mxu0 0.0
          %951 = vmatpush.msra.mxu0 0.0
          %952 = vmatpush.msra.mxu0 0.0
          %953 = vmatpush.msra.mxu0 0.0
          %954 = vmatpush.msra.mxu0 0.0
          %955 = vmatpush.msra.mxu0 0.0
          %956 = vmatpush.msra.mxu0 0.0
          %957 = vmatpush.msra.mxu0 0.0
          %958 = vmatpush.msra.mxu0 0.0
          %v959 = vand.u32 %v748, 4294901760
          %v960 = vsub.f32 %v748, %v959
          %v961 = vand.u32 %v960, 4294901760
          %962 = vmatpush.msra.mxu0 %v961
          %v963 = vand.u32 %v746, 4294901760
          %v964 = vsub.f32 %v746, %v963
          %v965 = vand.u32 %v964, 4294901760
          %966 = vmatpush.msra.mxu0 %v965
          %v967 = vand.u32 %v756, 4294901760
          %968 = vmatmul.f32.gmra.mxu0 %v967
          %v969 = vpop.f32.mrf.mxu0
          %v970 = vadd.f32 %v925, %v969
          %v971 = vand.u32 %v759, 4294901760
          %972 = vmatmul.f32.gmra.mxu0 %v971
          %v973 = vpop.f32.mrf.mxu0
          %v974 = vadd.f32 %v931, %v973
          %v975 = vand.u32 %v762, 4294901760
          %976 = vmatmul.f32.gmra.mxu0 %v975
          %v977 = vpop.f32.mrf.mxu0
          %v978 = vadd.f32 %v937, %v977
          %v979 = vand.u32 %v765, 4294901760
          %980 = vmatmul.f32.gmra.mxu0 %v979
          %v981 = vpop.f32.mrf.mxu0
          %v982 = vadd.f32 %v943, %v981
          %983 = vdwg.mxu0
          %984 = vmatpush.msra.mxu0 0.0
          %985 = vmatpush.msra.mxu0 0.0
          %986 = vmatpush.msra.mxu0 0.0
          %987 = vmatpush.msra.mxu0 0.0
          %988 = vmatpush.msra.mxu0 0.0
          %989 = vmatpush.msra.mxu0 0.0
          %990 = vmatpush.msra.mxu0 0.0
          %991 = vmatpush.msra.mxu0 0.0
          %992 = vmatpush.msra.mxu0 0.0
          %993 = vmatpush.msra.mxu0 0.0
          %994 = vmatpush.msra.mxu0 0.0
          %995 = vmatpush.msra.mxu0 0.0
          %996 = vmatpush.msra.mxu0 0.0
          %997 = vmatpush.msra.mxu0 0.0
          %v998 = vand.u32 %v748, 4294901760
          %999 = vmatpush.msra.mxu0 %v998
          %v1000 = vand.u32 %v746, 4294901760
          %1001 = vmatpush.msra.mxu0 %v1000
          %v1002 = vand.u32 %v756, 4294901760
          %1003 = vmatmul.f32.gmra.mxu0 %v1002
          %v1004 = vpop.f32.mrf.mxu0
          %v1005 = vadd.f32 %v970, %v1004
          %v1006 = vand.u32 %v759, 4294901760
          %1007 = vmatmul.f32.gmra.mxu0 %v1006
          %v1008 = vpop.f32.mrf.mxu0
          %v1009 = vadd.f32 %v974, %v1008
          %v1010 = vand.u32 %v762, 4294901760
          %1011 = vmatmul.f32.gmra.mxu0 %v1010
          %v1012 = vpop.f32.mrf.mxu0
          %v1013 = vadd.f32 %v978, %v1012
          %v1014 = vand.u32 %v765, 4294901760
          %1015 = vmatmul.f32.gmra.mxu0 %v1014
          %v1016 = vpop.f32.mrf.mxu0
          %v1017 = vadd.f32 %v982, %v1016
          %1018 = vdwg.mxu0
          %1019 = vmatpush.msra.mxu0 0.0
          %1020 = vmatpush.msra.mxu0 0.0
          %1021 = vmatpush.msra.mxu0 0.0
          %1022 = vmatpush.msra.mxu0 0.0
          %1023 = vmatpush.msra.mxu0 0.0
          %1024 = vmatpush.msra.mxu0 0.0
          %1025 = vmatpush.msra.mxu0 0.0
          %1026 = vmatpush.msra.mxu0 0.0
          %1027 = vmatpush.msra.mxu0 0.0
          %1028 = vmatpush.msra.mxu0 0.0
          %1029 = vmatpush.msra.mxu0 0.0
          %1030 = vmatpush.msra.mxu0 0.0
          %1031 = vmatpush.msra.mxu0 0.0
          %1032 = vmatpush.msra.mxu0 0.0
          %v1033 = vand.u32 %v749, 4294901760
          %1034 = vmatpush.msra.mxu0 %v1033
          %v1035 = vand.u32 %v747, 4294901760
          %1036 = vmatpush.msra.mxu0 %v1035
          %v1037 = vand.u32 %v756, 4294901760
          %v1038 = vsub.f32 %v756, %v1037
          %v1039 = vand.u32 %v1038, 4294901760
          %v1040 = vsub.f32 %v1038, %v1039
          %v1041 = vand.u32 %v1040, 4294901760
          %1042 = vmatmul.f32.gmra.mxu0 %v1041
          %v1043 = vpop.f32.mrf.mxu0
          %v1044 = vadd.f32 0.0, %v1043
          %v1045 = vand.u32 %v759, 4294901760
          %v1046 = vsub.f32 %v759, %v1045
          %v1047 = vand.u32 %v1046, 4294901760
          %v1048 = vsub.f32 %v1046, %v1047
          %v1049 = vand.u32 %v1048, 4294901760
          %1050 = vmatmul.f32.gmra.mxu0 %v1049
          %v1051 = vpop.f32.mrf.mxu0
          %v1052 = vadd.f32 0.0, %v1051
          %v1053 = vand.u32 %v762, 4294901760
          %v1054 = vsub.f32 %v762, %v1053
          %v1055 = vand.u32 %v1054, 4294901760
          %v1056 = vsub.f32 %v1054, %v1055
          %v1057 = vand.u32 %v1056, 4294901760
          %1058 = vmatmul.f32.gmra.mxu0 %v1057
          %v1059 = vpop.f32.mrf.mxu0
          %v1060 = vadd.f32 0.0, %v1059
          %v1061 = vand.u32 %v765, 4294901760
          %v1062 = vsub.f32 %v765, %v1061
          %v1063 = vand.u32 %v1062, 4294901760
          %v1064 = vsub.f32 %v1062, %v1063
          %v1065 = vand.u32 %v1064, 4294901760
          %1066 = vmatmul.f32.gmra.mxu0 %v1065
          %v1067 = vpop.f32.mrf.mxu0
          %v1068 = vadd.f32 0.0, %v1067
          %1069 = vdwg.mxu0
          %1070 = vmatpush.msra.mxu0 0.0
          %1071 = vmatpush.msra.mxu0 0.0
          %1072 = vmatpush.msra.mxu0 0.0
          %1073 = vmatpush.msra.mxu0 0.0
          %1074 = vmatpush.msra.mxu0 0.0
          %1075 = vmatpush.msra.mxu0 0.0
          %1076 = vmatpush.msra.mxu0 0.0
          %1077 = vmatpush.msra.mxu0 0.0
          %1078 = vmatpush.msra.mxu0 0.0
          %1079 = vmatpush.msra.mxu0 0.0
          %1080 = vmatpush.msra.mxu0 0.0
          %1081 = vmatpush.msra.mxu0 0.0
          %1082 = vmatpush.msra.mxu0 0.0
          %1083 = vmatpush.msra.mxu0 0.0
          %v1084 = vand.u32 %v749, 4294901760
          %v1085 = vsub.f32 %v749, %v1084
          %v1086 = vand.u32 %v1085, 4294901760
          %v1087 = vsub.f32 %v1085, %v1086
          %v1088 = vand.u32 %v1087, 4294901760
          %1089 = vmatpush.msra.mxu0 %v1088
          %v1090 = vand.u32 %v747, 4294901760
          %v1091 = vsub.f32 %v747, %v1090
          %v1092 = vand.u32 %v1091, 4294901760
          %v1093 = vsub.f32 %v1091, %v1092
          %v1094 = vand.u32 %v1093, 4294901760
          %1095 = vmatpush.msra.mxu0 %v1094
          %v1096 = vand.u32 %v756, 4294901760
          %1097 = vmatmul.f32.gmra.mxu0 %v1096
          %v1098 = vpop.f32.mrf.mxu0
          %v1099 = vadd.f32 %v1044, %v1098
          %v1100 = vand.u32 %v759, 4294901760
          %1101 = vmatmul.f32.gmra.mxu0 %v1100
          %v1102 = vpop.f32.mrf.mxu0
          %v1103 = vadd.f32 %v1052, %v1102
          %v1104 = vand.u32 %v762, 4294901760
          %1105 = vmatmul.f32.gmra.mxu0 %v1104
          %v1106 = vpop.f32.mrf.mxu0
          %v1107 = vadd.f32 %v1060, %v1106
          %v1108 = vand.u32 %v765, 4294901760
          %1109 = vmatmul.f32.gmra.mxu0 %v1108
          %v1110 = vpop.f32.mrf.mxu0
          %v1111 = vadd.f32 %v1068, %v1110
          %1112 = vdwg.mxu0
          %1113 = vmatpush.msra.mxu0 0.0
          %1114 = vmatpush.msra.mxu0 0.0
          %1115 = vmatpush.msra.mxu0 0.0
          %1116 = vmatpush.msra.mxu0 0.0
          %1117 = vmatpush.msra.mxu0 0.0
          %1118 = vmatpush.msra.mxu0 0.0
          %1119 = vmatpush.msra.mxu0 0.0
          %1120 = vmatpush.msra.mxu0 0.0
          %1121 = vmatpush.msra.mxu0 0.0
          %1122 = vmatpush.msra.mxu0 0.0
          %1123 = vmatpush.msra.mxu0 0.0
          %1124 = vmatpush.msra.mxu0 0.0
          %1125 = vmatpush.msra.mxu0 0.0
          %1126 = vmatpush.msra.mxu0 0.0
          %v1127 = vand.u32 %v749, 4294901760
          %v1128 = vsub.f32 %v749, %v1127
          %1129 = vmatpush.msra.mxu0 %v1128
          %v1130 = vand.u32 %v747, 4294901760
          %v1131 = vsub.f32 %v747, %v1130
          %1132 = vmatpush.msra.mxu0 %v1131
          %v1133 = vand.u32 %v756, 4294901760
          %v1134 = vsub.f32 %v756, %v1133
          %1135 = vmatmul.f32.gmra.mxu0 %v1134
          %v1136 = vpop.f32.mrf.mxu0
          %v1137 = vadd.f32 %v1099, %v1136
          %v1138 = vand.u32 %v759, 4294901760
          %v1139 = vsub.f32 %v759, %v1138
          %1140 = vmatmul.f32.gmra.mxu0 %v1139
          %v1141 = vpop.f32.mrf.mxu0
          %v1142 = vadd.f32 %v1103, %v1141
          %v1143 = vand.u32 %v762, 4294901760
          %v1144 = vsub.f32 %v762, %v1143
          %1145 = vmatmul.f32.gmra.mxu0 %v1144
          %v1146 = vpop.f32.mrf.mxu0
          %v1147 = vadd.f32 %v1107, %v1146
          %v1148 = vand.u32 %v765, 4294901760
          %v1149 = vsub.f32 %v765, %v1148
          %1150 = vmatmul.f32.gmra.mxu0 %v1149
          %v1151 = vpop.f32.mrf.mxu0
          %v1152 = vadd.f32 %v1111, %v1151
          %1153 = vdwg.mxu0
          %1154 = vmatpush.msra.mxu0 0.0
          %1155 = vmatpush.msra.mxu0 0.0
          %1156 = vmatpush.msra.mxu0 0.0
          %1157 = vmatpush.msra.mxu0 0.0
          %1158 = vmatpush.msra.mxu0 0.0
          %1159 = vmatpush.msra.mxu0 0.0
          %1160 = vmatpush.msra.mxu0 0.0
          %1161 = vmatpush.msra.mxu0 0.0
          %1162 = vmatpush.msra.mxu0 0.0
          %1163 = vmatpush.msra.mxu0 0.0
          %1164 = vmatpush.msra.mxu0 0.0
          %1165 = vmatpush.msra.mxu0 0.0
          %1166 = vmatpush.msra.mxu0 0.0
          %1167 = vmatpush.msra.mxu0 0.0
          %v1168 = vand.u32 %v749, 4294901760
          %1169 = vmatpush.msra.mxu0 %v1168
          %v1170 = vand.u32 %v747, 4294901760
          %1171 = vmatpush.msra.mxu0 %v1170
          %v1172 = vand.u32 %v756, 4294901760
          %v1173 = vsub.f32 %v756, %v1172
          %v1174 = vand.u32 %v1173, 4294901760
          %1175 = vmatmul.f32.gmra.mxu0 %v1174
          %v1176 = vpop.f32.mrf.mxu0
          %v1177 = vadd.f32 %v1137, %v1176
          %v1178 = vand.u32 %v759, 4294901760
          %v1179 = vsub.f32 %v759, %v1178
          %v1180 = vand.u32 %v1179, 4294901760
          %1181 = vmatmul.f32.gmra.mxu0 %v1180
          %v1182 = vpop.f32.mrf.mxu0
          %v1183 = vadd.f32 %v1142, %v1182
          %v1184 = vand.u32 %v762, 4294901760
          %v1185 = vsub.f32 %v762, %v1184
          %v1186 = vand.u32 %v1185, 4294901760
          %1187 = vmatmul.f32.gmra.mxu0 %v1186
          %v1188 = vpop.f32.mrf.mxu0
          %v1189 = vadd.f32 %v1147, %v1188
          %v1190 = vand.u32 %v765, 4294901760
          %v1191 = vsub.f32 %v765, %v1190
          %v1192 = vand.u32 %v1191, 4294901760
          %1193 = vmatmul.f32.gmra.mxu0 %v1192
          %v1194 = vpop.f32.mrf.mxu0
          %v1195 = vadd.f32 %v1152, %v1194
          %1196 = vdwg.mxu0
          %1197 = vmatpush.msra.mxu0 0.0
          %1198 = vmatpush.msra.mxu0 0.0
          %1199 = vmatpush.msra.mxu0 0.0
          %1200 = vmatpush.msra.mxu0 0.0
          %1201 = vmatpush.msra.mxu0 0.0
          %1202 = vmatpush.msra.mxu0 0.0
          %1203 = vmatpush.msra.mxu0 0.0
          %1204 = vmatpush.msra.mxu0 0.0
          %1205 = vmatpush.msra.mxu0 0.0
          %1206 = vmatpush.msra.mxu0 0.0
          %1207 = vmatpush.msra.mxu0 0.0
          %1208 = vmatpush.msra.mxu0 0.0
          %1209 = vmatpush.msra.mxu0 0.0
          %1210 = vmatpush.msra.mxu0 0.0
          %v1211 = vand.u32 %v749, 4294901760
          %v1212 = vsub.f32 %v749, %v1211
          %v1213 = vand.u32 %v1212, 4294901760
          %1214 = vmatpush.msra.mxu0 %v1213
          %v1215 = vand.u32 %v747, 4294901760
          %v1216 = vsub.f32 %v747, %v1215
          %v1217 = vand.u32 %v1216, 4294901760
          %1218 = vmatpush.msra.mxu0 %v1217
          %v1219 = vand.u32 %v756, 4294901760
          %1220 = vmatmul.f32.gmra.mxu0 %v1219
          %v1221 = vpop.f32.mrf.mxu0
          %v1222 = vadd.f32 %v1177, %v1221
          %v1223 = vand.u32 %v759, 4294901760
          %1224 = vmatmul.f32.gmra.mxu0 %v1223
          %v1225 = vpop.f32.mrf.mxu0
          %v1226 = vadd.f32 %v1183, %v1225
          %v1227 = vand.u32 %v762, 4294901760
          %1228 = vmatmul.f32.gmra.mxu0 %v1227
          %v1229 = vpop.f32.mrf.mxu0
          %v1230 = vadd.f32 %v1189, %v1229
          %v1231 = vand.u32 %v765, 4294901760
          %1232 = vmatmul.f32.gmra.mxu0 %v1231
          %v1233 = vpop.f32.mrf.mxu0
          %v1234 = vadd.f32 %v1195, %v1233
          %1235 = vdwg.mxu0
          %1236 = vmatpush.msra.mxu0 0.0
          %1237 = vmatpush.msra.mxu0 0.0
          %1238 = vmatpush.msra.mxu0 0.0
          %1239 = vmatpush.msra.mxu0 0.0
          %1240 = vmatpush.msra.mxu0 0.0
          %1241 = vmatpush.msra.mxu0 0.0
          %1242 = vmatpush.msra.mxu0 0.0
          %1243 = vmatpush.msra.mxu0 0.0
          %1244 = vmatpush.msra.mxu0 0.0
          %1245 = vmatpush.msra.mxu0 0.0
          %1246 = vmatpush.msra.mxu0 0.0
          %1247 = vmatpush.msra.mxu0 0.0
          %1248 = vmatpush.msra.mxu0 0.0
          %1249 = vmatpush.msra.mxu0 0.0
          %v1250 = vand.u32 %v749, 4294901760
          %1251 = vmatpush.msra.mxu0 %v1250
          %v1252 = vand.u32 %v747, 4294901760
          %1253 = vmatpush.msra.mxu0 %v1252
          %v1254 = vand.u32 %v756, 4294901760
          %1255 = vmatmul.f32.gmra.mxu0 %v1254
          %v1256 = vpop.f32.mrf.mxu0
          %v1257 = vadd.f32 %v1222, %v1256
          %v1258 = vand.u32 %v759, 4294901760
          %1259 = vmatmul.f32.gmra.mxu0 %v1258
          %v1260 = vpop.f32.mrf.mxu0
          %v1261 = vadd.f32 %v1226, %v1260
          %v1262 = vand.u32 %v762, 4294901760
          %1263 = vmatmul.f32.gmra.mxu0 %v1262
          %v1264 = vpop.f32.mrf.mxu0
          %v1265 = vadd.f32 %v1230, %v1264
          %v1266 = vand.u32 %v765, 4294901760
          %1267 = vmatmul.f32.gmra.mxu0 %v1266
          %v1268 = vpop.f32.mrf.mxu0
          %v1269 = vadd.f32 %v1234, %v1268
          %1270 = vdwg.mxu0
          %1271 = vst [vmem:[%s135] sm:$0xff] %v1005
          %1272 = vst [vmem:[%s135 + $0x8] sm:$0xff] %v1257
          %1273 = vst [vmem:[%s135 + $0x10] sm:$0xff] %v1009
          %1274 = vst [vmem:[%s135 + $0x18] sm:$0xff] %v1261
          %1275 = vst [vmem:[%s135 + $0x20] sm:$0xff] %v1013
          %1276 = vst [vmem:[%s135 + $0x28] sm:$0xff] %v1265
          %1277 = vst [vmem:[%s135 + $0x30] sm:$0xff] %v1017
          %1278 = vst [vmem:[%s135 + $0x38] sm:$0xff] %v1269
        $region36: #{tpu_custom_call.1} parent=27 // pred_fallthru
          _
        %s1279 = sand.u32 %s80, 1
        %s1280 = scalar_lea.sflag [#allocation3], %s1279
        %s1281 = sand.u32 %s80, 1
        %s1282 = smul.addr %s1281, 64
        %s1283 = scalar_lea.vmem [#allocation2], %s1282
        // Predicated region
        $region37: #{tpu_custom_call.1} parent=27 // pred_check
          %p1284 = pneg %p90
        $region38: #{tpu_custom_call.1} parent=27 // pred_check_branch
          %1286 = sbr.rel (%p1284) target = $region40
        $region39: #{tpu_custom_call.1} parent=27 // pred_region
          %s1287 = smul.u32 4, %s20
          %s1288 = smul.u32 2, %s21
          %1290 = vsyncadd %s1280, 0
          %s1291 = smul.addr %s1287, 2
          %s1292 = sadd.s32 %s1288, %s1291
          %s1293 = smul.addr %s1292, 8
          %s1294 = scalar_lea.hbm %s2, %s1293
          %s1295 = sshll.u32 %s1283, 4
          %s1296 = int_to_ptr.vmem [resolvable:$true] %s1295
          %s1297 = sshll.u32 %s1294, 4
          %s1298 = int_to_ptr.hbm [resolvable:$true] %s1297
          %1303 = dma.vmem_to_hbm [thread:$0]  %s1296, 1024, %s1298, %s1280, 256, 256, 16
        $region40: #{tpu_custom_call.1} parent=27 // pred_fallthru
          _
      $region28: #{tpu_custom_call.1} parent=5 // pred_fallthru
        _
      %p1304 = scmp.le.s32.totalorder 2, %s11
      // Predicated region
      $region41: #{tpu_custom_call.1} parent=5 // pred_check
        %p1305 = pneg %p1304
      $region42: #{tpu_custom_call.1} parent=5 // pred_check_branch
        %1307 = sbr.rel (%p1305) target = $region44
      $region43: #{tpu_custom_call.1} parent=5 // pred_region
        %s1308 = ssub.s32 %s11, 2
        // Predicated region
        $region45: #{tpu_custom_call.1} parent=43 // pred_check
          %p1309 = pneg %p96
        $region46: #{tpu_custom_call.1} parent=43 // pred_check_branch
          %1311 = sbr.rel (%p1309) target = $region48
        $region47: #{tpu_custom_call.1} parent=43 // pred_region
          %s1312 = sand.u32 %s81, 1
          %s1313 = scalar_lea.sflag [#allocation3], %s1312
          %s1314 = sand.u32 %s81, 1
          %s1315 = smul.addr %s1314, 64
          %s1316 = scalar_lea.vmem [#allocation2], %s1315
          %1318 = dma.done %s1313, 1024
        $region48: #{tpu_custom_call.1} parent=43 // pred_fallthru
          _
      $region44: #{tpu_custom_call.1} parent=5 // pred_fallthru
        _
    $region6: #{tpu_custom_call.1} parent=1 // loop_footer
      %s15 = sadd.s32 1, %s11
    $region7: #{tpu_custom_call.1} parent=1 // loop_footer_branch
      %10 = sbr.rel target = $region3
    $region8: #{tpu_custom_call.1} parent=1 // loop_exit
      _
    %1319 = vsyncpa [#allocation3], 1
    %s1320 = scalar_lea.sflag [#allocation3], 1
    %1321 = vsyncpa %s1320, 1

</llo_original>
